<compile_context>
chip_gen: v7x
topology: tpu7x:2x2x1
jax: 0.10.0
libtpu: 0.0.40
codegen_flags: <defaults>
</compile_context>

<pallas_src>
import functools

import jax
import jax.numpy as jnp
import numpy as np
from jax.experimental import pallas as pl
from jax.experimental.pallas import tpu as pltpu


# ----------------------------------------------------------------------------
# Kernel: one grid step handles one batch element (all L layers, all tokens).
# ----------------------------------------------------------------------------
def _image_adapter_kernel(
    feat_ref,                               # (L, T, H)   this batch element
    m1_ref,                                 # (L, H)      mask1 (resident)
    m2_ref,                                 # (L, H)      mask2 (resident)
    w1a_ref, b1a_ref, w2a_ref, b2a_ref,     # adapter1 params (resident)
    w1b_ref, b1b_ref, w2b_ref, b2b_ref,     # adapter2 params (resident)
    out_ref,                                # (L, O)
):
    x = feat_ref[...]                       # (L, T, H)
    L, T, H = x.shape
    P = T - 1

    # ---- CLS path: sigmoid(mask1) * cls -> Linear -> ReLU -> Linear ----
    s1 = jax.nn.sigmoid(m1_ref[...])        # (L, H), once per layer
    x1 = s1 * x[:, 0, :]                    # (L, H)
    h1 = jnp.maximum(
        jnp.dot(x1, w1a_ref[...], preferred_element_type=jnp.float32)
        + b1a_ref[...],
        0.0,
    )
    y1 = (
        jnp.dot(h1, w2a_ref[...], preferred_element_type=jnp.float32)
        + b2a_ref[...]
    )                                       # (L, O)

    # ---- patch path: mask -> Linear -> ReLU -> mean over patches -> Linear
    # (mean commutes with the second Linear, so reduce BEFORE the matmul).
    s2 = jax.nn.sigmoid(m2_ref[...])        # (L, H), once per layer
    x2 = (s2[:, None, :] * x[:, 1:, :]).reshape(L * P, H)   # (L*P, H)
    h2 = jnp.maximum(
        jnp.dot(x2, w1b_ref[...], preferred_element_type=jnp.float32)
        + b1b_ref[...],
        0.0,
    )                                       # (L*P, H)
    h2_mean = jnp.mean(h2.reshape(L, P, -1), axis=1)        # (L, H)
    y2 = (
        jnp.dot(h2_mean, w2b_ref[...], preferred_element_type=jnp.float32)
        + b2b_ref[...]
    )                                       # (L, O)

    out_ref[...] = (y1 + y2).astype(out_ref.dtype)


# ----------------------------------------------------------------------------
# Wrapper
# ----------------------------------------------------------------------------
@jax.jit
def image_adapter_forward(features, params):
    """features: (B, L, T, H) float32.  Returns (B, L, O) float32."""
    B, L, T, H = features.shape
    O = params["w2a"].shape[1]

    def resident_spec(a):
        # Parameter / mask arrays: same block every grid step -> stays in VMEM.
        return pl.BlockSpec(a.shape, lambda b: (0, 0))

    feat_spec = pl.BlockSpec((pl.Squeezed(), L, T, H), lambda b: (b, 0, 0, 0))
    out_spec = pl.BlockSpec((pl.Squeezed(), L, O), lambda b: (b, 0, 0))

    args = (
        features,
        params["mask1"], params["mask2"],
        params["w1a"], params["b1a"], params["w2a"], params["b2a"],
        params["w1b"], params["b1b"], params["w2b"], params["b2b"],
    )
    in_specs = [feat_spec] + [resident_spec(a) for a in args[1:]]

    out = pl.pallas_call(
        _image_adapter_kernel,
        out_shape=jax.ShapeDtypeStruct((B, L, O), jnp.float32),
        grid=(B,),
        in_specs=in_specs,
        out_specs=out_spec,
        compiler_params=pltpu.CompilerParams(
            dimension_semantics=("parallel",),
        ),
    )(*args)
    return out


# ----------------------------------------------------------------------------
# Pure-JAX reference (mirrors the PyTorch forward exactly)
# ----------------------------------------------------------------------------
def image_adapter_reference(features, params):
    def mlp(x, w1, b1, w2, b2):
        return jnp.maximum(x @ w1 + b1, 0.0) @ w2 + b2

    s1 = jax.nn.sigmoid(params["mask1"])                       # (L, H)
    masked_cls = features[:, :, 0, :] * s1[None, :, :]         # (B, L, H)
    y1 = mlp(masked_cls, params["w1a"], params["b1a"],
             params["w2a"], params["b2a"])                     # (B, L, O)

    s2 = jax.nn.sigmoid(params["mask2"])                       # (L, H)
    masked_pat = features[:, :, 1:, :] * s2[None, :, None, :]  # (B, L, P, H)
    y2 = mlp(masked_pat, params["w1b"], params["b1b"],
             params["w2b"], params["b2b"]).mean(axis=-2)       # (B, L, O)
    return y1 + y2


# ----------------------------------------------------------------------------
# Params (PyTorch Linear stores W as (out,in); here we build (in,out) directly)
# ----------------------------------------------------------------------------
def make_params(key, hidden_size, output_size, n_layers):
    ks = jax.random.split(key, 10)
    scale_h = 1.0 / np.sqrt(hidden_size)
    return {
        "mask1": 0.1 * jax.random.normal(ks[0], (n_layers, hidden_size), jnp.float32),
        "mask2": 0.1 * jax.random.normal(ks[1], (n_layers, hidden_size), jnp.float32),
        # adapter1: Linear(H,H) -> ReLU -> Linear(H,O)
        "w1a": scale_h * jax.random.normal(ks[2], (hidden_size, hidden_size), jnp.float32),
        "b1a": scale_h * jax.random.normal(ks[3], (1, hidden_size), jnp.float32),
        "w2a": scale_h * jax.random.normal(ks[4], (hidden_size, output_size), jnp.float32),
        "b2a": scale_h * jax.random.normal(ks[5], (1, output_size), jnp.float32),
        # adapter2
        "w1b": scale_h * jax.random.normal(ks[6], (hidden_size, hidden_size), jnp.float32),
        "b1b": scale_h * jax.random.normal(ks[7], (1, hidden_size), jnp.float32),
        "w2b": scale_h * jax.random.normal(ks[8], (hidden_size, output_size), jnp.float32),
        "b2b": scale_h * jax.random.normal(ks[9], (1, output_size), jnp.float32),
    }


# ----------------------------------------------------------------------------
# Main
# ----------------------------------------------------------------------------
if __name__ == "__main__":
    # Small shapes consistent with the module's forward:
    #   features: (batch=2, n_layers=4, tokens=9 (1 CLS + 8 patches), hidden=128)
    B, L, T, H, O = 2, 4, 9, 128, 128

    key = jax.random.PRNGKey(0)
    k_feat, k_par = jax.random.split(key)
    features = jax.random.normal(k_feat, (B, L, T, H), jnp.float32)
    params = make_params(k_par, hidden_size=H, output_size=O, n_layers=L)

    out = image_adapter_forward(features, params)
    out = jax.block_until_ready(out)

    ref = image_adapter_reference(features, params)
    assert out.shape == (B, L, O), out.shape
    if not np.allclose(np.asarray(out), np.asarray(ref), rtol=1e-3, atol=1e-3):
        raise AssertionError("Pallas kernel output does not match reference")

    print("KERNEL_OK")
</pallas_src>

<mosaic_0001>
module attributes {stable_mosaic.version = 11 : i64} {
  func.func @_image_adapter_kernel(%arg0: i32, %arg1: memref<1x4x9x128xf32, #tpu.memory_space<vmem>>, %arg2: memref<4x128xf32, #tpu.memory_space<vmem>>, %arg3: memref<4x128xf32, #tpu.memory_space<vmem>>, %arg4: memref<128x128xf32, #tpu.memory_space<vmem>>, %arg5: memref<1x128xf32, #tpu.memory_space<vmem>>, %arg6: memref<128x128xf32, #tpu.memory_space<vmem>>, %arg7: memref<1x128xf32, #tpu.memory_space<vmem>>, %arg8: memref<128x128xf32, #tpu.memory_space<vmem>>, %arg9: memref<1x128xf32, #tpu.memory_space<vmem>>, %arg10: memref<128x128xf32, #tpu.memory_space<vmem>>, %arg11: memref<1x128xf32, #tpu.memory_space<vmem>>, %arg12: memref<1x4x128xf32, #tpu.memory_space<vmem>>) attributes {dimension_semantics = [#tpu.dimension_semantics<parallel>], iteration_bounds = array<i64: 2>, scalar_prefetch = 0 : i64, scratch_operands = 0 : i64, tpu.core_type = #tpu.core_type<tc>, window_params = [{transform_indices = @transform_0, window_bounds = array<i64: 1, 4, 9, 128>}, {pipeline_mode = #tpu.pipeline_mode<synchronous>, transform_indices = @transform_1, window_bounds = array<i64: 4, 128>}, {pipeline_mode = #tpu.pipeline_mode<synchronous>, transform_indices = @transform_2, window_bounds = array<i64: 4, 128>}, {pipeline_mode = #tpu.pipeline_mode<synchronous>, transform_indices = @transform_3, window_bounds = array<i64: 128, 128>}, {pipeline_mode = #tpu.pipeline_mode<synchronous>, transform_indices = @transform_4, window_bounds = array<i64: 1, 128>}, {pipeline_mode = #tpu.pipeline_mode<synchronous>, transform_indices = @transform_5, window_bounds = array<i64: 128, 128>}, {pipeline_mode = #tpu.pipeline_mode<synchronous>, transform_indices = @transform_6, window_bounds = array<i64: 1, 128>}, {pipeline_mode = #tpu.pipeline_mode<synchronous>, transform_indices = @transform_7, window_bounds = array<i64: 128, 128>}, {pipeline_mode = #tpu.pipeline_mode<synchronous>, transform_indices = @transform_8, window_bounds = array<i64: 1, 128>}, {pipeline_mode = #tpu.pipeline_mode<synchronous>, transform_indices = @transform_9, window_bounds = array<i64: 128, 128>}, {pipeline_mode = #tpu.pipeline_mode<synchronous>, transform_indices = @transform_10, window_bounds = array<i64: 1, 128>}, {transform_indices = @transform_11, window_bounds = array<i64: 1, 4, 128>}]} {
    %c0 = arith.constant 0 : index
    %c0_0 = arith.constant 0 : index
    %c0_1 = arith.constant 0 : index
    %c0_2 = arith.constant 0 : index
    %0 = vector.load %arg1[%c0, %c0_0, %c0_1, %c0_2] : memref<1x4x9x128xf32, #tpu.memory_space<vmem>>, vector<1x4x9x128xf32>
    %1 = vector.shape_cast %0 : vector<1x4x9x128xf32> to vector<4x9x128xf32>
    %c0_3 = arith.constant 0 : index
    %c0_4 = arith.constant 0 : index
    %2 = vector.load %arg2[%c0_3, %c0_4] : memref<4x128xf32, #tpu.memory_space<vmem>>, vector<4x128xf32>
    %3 = arith.negf %2 : vector<4x128xf32>
    %4 = math.exp %3 : vector<4x128xf32>
    %cst = arith.constant 1.000000e+00 : f32
    %5 = vector.broadcast %cst : f32 to vector<4x128xf32>
    %6 = arith.addf %5, %4 : vector<4x128xf32>
    %7 = arith.divf %5, %6 : vector<4x128xf32>
    %8 = vector.extract_strided_slice %1 {offsets = [0, 0, 0], sizes = [4, 1, 128], strides = [1, 1, 1]} : vector<4x9x128xf32> to vector<4x1x128xf32>
    %9 = vector.shape_cast %8 : vector<4x1x128xf32> to vector<4x128xf32>
    %10 = arith.mulf %7, %9 : vector<4x128xf32>
    %c0_5 = arith.constant 0 : index
    %c0_6 = arith.constant 0 : index
    %11 = vector.load %arg4[%c0_5, %c0_6] : memref<128x128xf32, #tpu.memory_space<vmem>>, vector<128x128xf32>
    %cst_7 = arith.constant dense<0.000000e+00> : vector<4x128xf32>
    %12 = tpu.matmul %10, %11, %cst_7 {dimension_numbers = #tpu.dot_dimension_numbers<[1], [0], [0], [1], [0, 0, 1, 1], [], []>} : vector<4x128xf32>, vector<128x128xf32>, vector<4x128xf32> -> vector<4x128xf32>
    %c0_8 = arith.constant 0 : index
    %c0_9 = arith.constant 0 : index
    %13 = vector.load %arg5[%c0_8, %c0_9] : memref<1x128xf32, #tpu.memory_space<vmem>>, vector<1x128xf32>
    %14 = vector.broadcast %13 : vector<1x128xf32> to vector<4x128xf32>
    %15 = arith.addf %12, %14 : vector<4x128xf32>
    %cst_10 = arith.constant 0.000000e+00 : f32
    %16 = vector.broadcast %cst_10 : f32 to vector<4x128xf32>
    %17 = arith.maximumf %15, %16 : vector<4x128xf32>
    %c0_11 = arith.constant 0 : index
    %c0_12 = arith.constant 0 : index
    %18 = vector.load %arg6[%c0_11, %c0_12] : memref<128x128xf32, #tpu.memory_space<vmem>>, vector<128x128xf32>
    %cst_13 = arith.constant dense<0.000000e+00> : vector<4x128xf32>
    %19 = tpu.matmul %17, %18, %cst_13 {dimension_numbers = #tpu.dot_dimension_numbers<[1], [0], [0], [1], [0, 0, 1, 1], [], []>} : vector<4x128xf32>, vector<128x128xf32>, vector<4x128xf32> -> vector<4x128xf32>
    %c0_14 = arith.constant 0 : index
    %c0_15 = arith.constant 0 : index
    %20 = vector.load %arg7[%c0_14, %c0_15] : memref<1x128xf32, #tpu.memory_space<vmem>>, vector<1x128xf32>
    %21 = vector.broadcast %20 : vector<1x128xf32> to vector<4x128xf32>
    %22 = arith.addf %19, %21 : vector<4x128xf32>
    %c0_16 = arith.constant 0 : index
    %c0_17 = arith.constant 0 : index
    %23 = vector.load %arg3[%c0_16, %c0_17] : memref<4x128xf32, #tpu.memory_space<vmem>>, vector<4x128xf32>
    %24 = arith.negf %23 : vector<4x128xf32>
    %25 = math.exp %24 : vector<4x128xf32>
    %cst_18 = arith.constant 1.000000e+00 : f32
    %26 = vector.broadcast %cst_18 : f32 to vector<4x128xf32>
    %27 = arith.addf %26, %25 : vector<4x128xf32>
    %28 = arith.divf %26, %27 : vector<4x128xf32>
    %29 = vector.shape_cast %28 : vector<4x128xf32> to vector<4x1x128xf32>
    %30 = vector.extract_strided_slice %1 {offsets = [0, 1, 0], sizes = [4, 8, 128], strides = [1, 1, 1]} : vector<4x9x128xf32> to vector<4x8x128xf32>
    %31 = vector.broadcast %29 : vector<4x1x128xf32> to vector<4x8x128xf32>
    %32 = arith.mulf %31, %30 : vector<4x8x128xf32>
    %33 = vector.shape_cast %32 : vector<4x8x128xf32> to vector<32x128xf32>
    %c0_19 = arith.constant 0 : index
    %c0_20 = arith.constant 0 : index
    %34 = vector.load %arg8[%c0_19, %c0_20] : memref<128x128xf32, #tpu.memory_space<vmem>>, vector<128x128xf32>
    %cst_21 = arith.constant dense<0.000000e+00> : vector<32x128xf32>
    %35 = tpu.matmul %33, %34, %cst_21 {dimension_numbers = #tpu.dot_dimension_numbers<[1], [0], [0], [1], [0, 0, 1, 1], [], []>} : vector<32x128xf32>, vector<128x128xf32>, vector<32x128xf32> -> vector<32x128xf32>
    %c0_22 = arith.constant 0 : index
    %c0_23 = arith.constant 0 : index
    %36 = vector.load %arg9[%c0_22, %c0_23] : memref<1x128xf32, #tpu.memory_space<vmem>>, vector<1x128xf32>
    %37 = vector.broadcast %36 : vector<1x128xf32> to vector<32x128xf32>
    %38 = arith.addf %35, %37 : vector<32x128xf32>
    %cst_24 = arith.constant 0.000000e+00 : f32
    %39 = vector.broadcast %cst_24 : f32 to vector<32x128xf32>
    %40 = arith.maximumf %38, %39 : vector<32x128xf32>
    %41 = vector.shape_cast %40 : vector<32x128xf32> to vector<4x8x128xf32>
    %cst_25 = arith.constant dense<0.000000e+00> : vector<4x128xf32>
    %42 = vector.multi_reduction <add>, %41, %cst_25 [1] : vector<4x8x128xf32> to vector<4x128xf32>
    %cst_26 = arith.constant 8.000000e+00 : f32
    %43 = vector.broadcast %cst_26 : f32 to vector<4x128xf32>
    %44 = arith.divf %42, %43 : vector<4x128xf32>
    %c0_27 = arith.constant 0 : index
    %c0_28 = arith.constant 0 : index
    %45 = vector.load %arg10[%c0_27, %c0_28] : memref<128x128xf32, #tpu.memory_space<vmem>>, vector<128x128xf32>
    %cst_29 = arith.constant dense<0.000000e+00> : vector<4x128xf32>
    %46 = tpu.matmul %44, %45, %cst_29 {dimension_numbers = #tpu.dot_dimension_numbers<[1], [0], [0], [1], [0, 0, 1, 1], [], []>} : vector<4x128xf32>, vector<128x128xf32>, vector<4x128xf32> -> vector<4x128xf32>
    %c0_30 = arith.constant 0 : index
    %c0_31 = arith.constant 0 : index
    %47 = vector.load %arg11[%c0_30, %c0_31] : memref<1x128xf32, #tpu.memory_space<vmem>>, vector<1x128xf32>
    %48 = vector.broadcast %47 : vector<1x128xf32> to vector<4x128xf32>
    %49 = arith.addf %46, %48 : vector<4x128xf32>
    %50 = arith.addf %22, %49 : vector<4x128xf32>
    %c0_32 = arith.constant 0 : index
    %c0_33 = arith.constant 0 : index
    %c0_34 = arith.constant 0 : index
    %51 = vector.load %arg12[%c0_32, %c0_33, %c0_34] : memref<1x4x128xf32, #tpu.memory_space<vmem>>, vector<1x4x128xf32>
    %52 = vector.shape_cast %51 : vector<1x4x128xf32> to vector<4x128xf32>
    %53 = vector.shape_cast %50 : vector<4x128xf32> to vector<1x4x128xf32>
    tpu.vector_store %arg12[%c0_32, %c0_33, %c0_34], %53 {strides = array<i32>} : memref<1x4x128xf32, #tpu.memory_space<vmem>>, vector<1x4x128xf32>,
    return
  }
  func.func @transform_0(%arg0: i32) -> (i32, i32, i32, i32) {
    %c0_i32 = arith.constant 0 : i32
    %c0_i32_0 = arith.constant 0 : i32
    %c0_i32_1 = arith.constant 0 : i32
    %c0_i32_2 = arith.constant 0 : i32
    return %arg0, %c0_i32, %c0_i32_0, %c0_i32_1 : i32, i32, i32, i32
  }
  func.func @transform_1(%arg0: i32) -> (i32, i32) {
    %c0_i32 = arith.constant 0 : i32
    %c0_i32_0 = arith.constant 0 : i32
    %c0_i32_1 = arith.constant 0 : i32
    return %c0_i32, %c0_i32_0 : i32, i32
  }
  func.func @transform_2(%arg0: i32) -> (i32, i32) {
    %c0_i32 = arith.constant 0 : i32
    %c0_i32_0 = arith.constant 0 : i32
    %c0_i32_1 = arith.constant 0 : i32
    return %c0_i32, %c0_i32_0 : i32, i32
  }
  func.func @transform_3(%arg0: i32) -> (i32, i32) {
    %c0_i32 = arith.constant 0 : i32
    %c0_i32_0 = arith.constant 0 : i32
    %c0_i32_1 = arith.constant 0 : i32
    return %c0_i32, %c0_i32_0 : i32, i32
  }
  func.func @transform_4(%arg0: i32) -> (i32, i32) {
    %c0_i32 = arith.constant 0 : i32
    %c0_i32_0 = arith.constant 0 : i32
    %c0_i32_1 = arith.constant 0 : i32
    return %c0_i32, %c0_i32_0 : i32, i32
  }
  func.func @transform_5(%arg0: i32) -> (i32, i32) {
    %c0_i32 = arith.constant 0 : i32
    %c0_i32_0 = arith.constant 0 : i32
    %c0_i32_1 = arith.constant 0 : i32
    return %c0_i32, %c0_i32_0 : i32, i32
  }
  func.func @transform_6(%arg0: i32) -> (i32, i32) {
    %c0_i32 = arith.constant 0 : i32
    %c0_i32_0 = arith.constant 0 : i32
    %c0_i32_1 = arith.constant 0 : i32
    return %c0_i32, %c0_i32_0 : i32, i32
  }
  func.func @transform_7(%arg0: i32) -> (i32, i32) {
    %c0_i32 = arith.constant 0 : i32
    %c0_i32_0 = arith.constant 0 : i32
    %c0_i32_1 = arith.constant 0 : i32
    return %c0_i32, %c0_i32_0 : i32, i32
  }
  func.func @transform_8(%arg0: i32) -> (i32, i32) {
    %c0_i32 = arith.constant 0 : i32
    %c0_i32_0 = arith.constant 0 : i32
    %c0_i32_1 = arith.constant 0 : i32
    return %c0_i32, %c0_i32_0 : i32, i32
  }
  func.func @transform_9(%arg0: i32) -> (i32, i32) {
    %c0_i32 = arith.constant 0 : i32
    %c0_i32_0 = arith.constant 0 : i32
    %c0_i32_1 = arith.constant 0 : i32
    return %c0_i32, %c0_i32_0 : i32, i32
  }
  func.func @transform_10(%arg0: i32) -> (i32, i32) {
    %c0_i32 = arith.constant 0 : i32
    %c0_i32_0 = arith.constant 0 : i32
    %c0_i32_1 = arith.constant 0 : i32
    return %c0_i32, %c0_i32_0 : i32, i32
  }
  func.func @transform_11(%arg0: i32) -> (i32, i32, i32) {
    %c0_i32 = arith.constant 0 : i32
    %c0_i32_0 = arith.constant 0 : i32
    %c0_i32_1 = arith.constant 0 : i32
    return %arg0, %c0_i32, %c0_i32_0 : i32, i32, i32
  }
}

</mosaic_0001>

<llo_original>
// kernel: image_adapter_forward.1
$region0: #{image_adapter_forward.1}
  #allocation0 [shape = 'u32[]', space=smem, size = 0x4, offset = 0x4, fixed_abs, tag = 'smem constant byte address 0x4 - core index']
  #allocation1 [shape = 'u32[144,128]{1,0:T(1,128)}', space=vmem, size = 0x12000, scoped, tag = 'internal scratch']
  %s0 = inlined_call_operand.vmem [shape: f32[2,4,9,128], index: 0, kind: input, shape index: {}]
  %s1 = inlined_call_operand.vmem [shape: f32[4,128], index: 1, kind: input, shape index: {}]
  %s2 = inlined_call_operand.vmem [shape: f32[4,128], index: 2, kind: input, shape index: {}]
  %s3 = inlined_call_operand.vmem [shape: f32[128,128], index: 3, kind: input, shape index: {}]
  %s4 = inlined_call_operand.vmem [shape: f32[1,128], index: 4, kind: input, shape index: {}]
  %s5 = inlined_call_operand.hbm [shape: f32[128,128], index: 5, kind: input, shape index: {}]
  %s6 = inlined_call_operand.vmem [shape: f32[1,128], index: 6, kind: input, shape index: {}]
  %s7 = inlined_call_operand.hbm [shape: f32[128,128], index: 7, kind: input, shape index: {}]
  %s8 = inlined_call_operand.vmem [shape: f32[1,128], index: 8, kind: input, shape index: {}]
  %s9 = inlined_call_operand.hbm [shape: f32[128,128], index: 9, kind: input, shape index: {}]
  %s10 = inlined_call_operand.vmem [shape: f32[1,128], index: 10, kind: input, shape index: {}]
  %s11 = inlined_call_operand.hbm [shape: f32[2,4,128], index: 11, kind: output, shape index: {}]
  %s12 = sld [smem:[#allocation0]]
  $region89: #{image_adapter_forward.1} parent=0
    _
  %s14 = ssub.s32 1, %s12
  %s15 = scalar_select 0, %s14, %s12
  $region1: #{image_adapter_forward.1} parent=0
    #allocation2 [shape = 'u8[65536]{0}', space=vmem, size = 0x10000, scoped, tag = 'input window, operand 5, single buffered']
    #allocation3 [shape = 's32[2]{0}', space=sflag, size = 0x8, scoped, tag = 'scoped memory for image_adapter_forward.1']
    #allocation4 [shape = 's32[2]{0}', space=sflag, size = 0x8, scoped, tag = 'scoped memory for image_adapter_forward.1']
    #allocation5 [shape = 'u8[65536]{0}', space=vmem, size = 0x10000, scoped, tag = 'input window, operand 7, single buffered']
    #allocation6 [shape = 's32[1]{0}', space=sflag, size = 0x4, scoped, tag = 'scoped memory for image_adapter_forward.1']
    #allocation7 [shape = 'u8[65536]{0}', space=vmem, size = 0x10000, scoped, tag = 'input window, operand 9, single buffered']
    #allocation8 [shape = 'u8[4096]{0}', space=vmem, size = 0x1000, scoped, tag = 'output window, operand 0']
    %16 = vsyncpa [#allocation3], 0
    %17 = vsyncpa [#allocation6], 0
    %18 = vsyncpa [#allocation4], 0
    %s19 = scalar_lea.sflag [#allocation4], 1
    %20 = vsyncpa %s19, 0
    loop: start=0, step=1, limit=4
    $region2: #{image_adapter_forward.1} parent=1 // loop_pre_header
      _
    $region3: #{image_adapter_forward.1} parent=1 // loop_header
      %s22 = sphi 0, %s26
      %p23 = scmp.ge.s32.totalorder %s22, 4
      %s32 = sphi 0, %s34
      %s35 = sphi 0, %s32
      %s36 = sphi 0, %s35
      %s52 = sphi 0, %s36
      %s56 = sphi 0, %s56
      %s58 = sphi 0, %s56
      %s59 = sphi 0, %s58
      %s73 = sphi 0, %s59
      %s77 = sphi 0, %s77
      %s79 = sphi 0, %s77
      %s80 = sphi 0, %s79
      %s94 = sphi 0, %s80
      %s98 = sphi 0, %s98
      %s100 = sphi 0, %s98
      %s101 = sphi 0, %s100
      %s115 = sphi 0, %s101
      %s119 = sphi 0, %s119
      %s121 = sphi 0, %s119
      %s122 = sphi 0, %s121
      %s136 = sphi 0, %s122
      %s140 = sphi 0, %s140
      %s142 = sphi 0, %s140
      %s143 = sphi 0, %s142
      %s157 = sphi 0, %s143
      %s161 = sphi 0, %s161
      %s163 = sphi 0, %s161
      %s164 = sphi 0, %s163
      %s178 = sphi 0, %s164
      %s182 = sphi 0, %s182
      %s184 = sphi 0, %s182
      %s185 = sphi 0, %s184
      %s199 = sphi 0, %s185
      %s203 = sphi 0, %s203
      %s205 = sphi 0, %s203
      %s206 = sphi 0, %s205
      %s220 = sphi 0, %s206
      %s224 = sphi 0, %s224
      %s226 = sphi 0, %s224
      %s227 = sphi 0, %s226
      %s241 = sphi 0, %s227
      %s245 = sphi 0, %s245
      %s247 = sphi 0, %s245
      %s248 = sphi 0, %s247
      %s262 = sphi 0, %s248
      %s268 = sphi 0, %s270
      %s271 = sphi 0, %s268
      %s272 = sphi 0, %s271
      %s288 = sphi 0, %s272
    $region4: #{image_adapter_forward.1} parent=1 // loop_header_branch
      %25 = sbr.rel (%p23) target = $region8
    $region5: #{image_adapter_forward.1} parent=1 // loop_body
      %s27 = ssub.s32 %s22, 1
      %s28 = ssub.s32 %s22, 2
      %s29 = sadd.s32 %s22, 1
      %s30 = ssub.s32 %s22, %s29
      %p31 = scmp.eq.s32.totalorder %s30, 0
      %s33 = sadd.s32 %s32, 1
      %s34 = scalar_select %p31, %s32, %s33
      %p37 = pneg %p31
      %p38 = scmp.eq.s32.totalorder %s22, 1
      %p39 = por %p37, %p38
      %p40 = scmp.ne.s32.totalorder %s32, %s35
      %p41 = scmp.eq.s32.totalorder %s22, 0
      %p42 = por %p40, %p41
      %p43 = scmp.ne.s32.totalorder %s32, %s35
      %p44 = scmp.eq.s32.totalorder %s27, 1
      %p45 = por %p43, %p44
      %p46 = scmp.ne.s32.totalorder %s35, %s36
      %p47 = scmp.eq.s32.totalorder %s27, 0
      %p48 = por %p46, %p47
      %p49 = scmp.ne.s32.totalorder %s35, %s36
      %p50 = scmp.eq.s32.totalorder %s28, 1
      %p51 = por %p49, %p50
      %p53 = scmp.ne.s32.totalorder %s36, %s52
      %p54 = scmp.eq.s32.totalorder %s28, 0
      %p55 = por %p53, %p54
      %s57 = sadd.s32 %s56, 1
      %p60 = scmp.eq.s32.totalorder %s22, 1
      %p61 = scmp.ne.s32.totalorder %s56, %s58
      %p62 = scmp.eq.s32.totalorder %s22, 0
      %p63 = por %p61, %p62
      %p64 = scmp.ne.s32.totalorder %s56, %s58
      %p65 = scmp.eq.s32.totalorder %s27, 1
      %p66 = por %p64, %p65
      %p67 = scmp.ne.s32.totalorder %s58, %s59
      %p68 = scmp.eq.s32.totalorder %s27, 0
      %p69 = por %p67, %p68
      %p70 = scmp.ne.s32.totalorder %s58, %s59
      %p71 = scmp.eq.s32.totalorder %s28, 1
      %p72 = por %p70, %p71
      %p74 = scmp.ne.s32.totalorder %s59, %s73
      %p75 = scmp.eq.s32.totalorder %s28, 0
      %p76 = por %p74, %p75
      %s78 = sadd.s32 %s77, 1
      %p81 = scmp.eq.s32.totalorder %s22, 1
      %p82 = scmp.ne.s32.totalorder %s77, %s79
      %p83 = scmp.eq.s32.totalorder %s22, 0
      %p84 = por %p82, %p83
      %p85 = scmp.ne.s32.totalorder %s77, %s79
      %p86 = scmp.eq.s32.totalorder %s27, 1
      %p87 = por %p85, %p86
      %p88 = scmp.ne.s32.totalorder %s79, %s80
      %p89 = scmp.eq.s32.totalorder %s27, 0
      %p90 = por %p88, %p89
      %p91 = scmp.ne.s32.totalorder %s79, %s80
      %p92 = scmp.eq.s32.totalorder %s28, 1
      %p93 = por %p91, %p92
      %p95 = scmp.ne.s32.totalorder %s80, %s94
      %p96 = scmp.eq.s32.totalorder %s28, 0
      %p97 = por %p95, %p96
      %s99 = sadd.s32 %s98, 1
      %p102 = scmp.eq.s32.totalorder %s22, 1
      %p103 = scmp.ne.s32.totalorder %s98, %s100
      %p104 = scmp.eq.s32.totalorder %s22, 0
      %p105 = por %p103, %p104
      %p106 = scmp.ne.s32.totalorder %s98, %s100
      %p107 = scmp.eq.s32.totalorder %s27, 1
      %p108 = por %p106, %p107
      %p109 = scmp.ne.s32.totalorder %s100, %s101
      %p110 = scmp.eq.s32.totalorder %s27, 0
      %p111 = por %p109, %p110
      %p112 = scmp.ne.s32.totalorder %s100, %s101
      %p113 = scmp.eq.s32.totalorder %s28, 1
      %p114 = por %p112, %p113
      %p116 = scmp.ne.s32.totalorder %s101, %s115
      %p117 = scmp.eq.s32.totalorder %s28, 0
      %p118 = por %p116, %p117
      %s120 = sadd.s32 %s119, 1
      %p123 = scmp.eq.s32.totalorder %s22, 1
      %p124 = scmp.ne.s32.totalorder %s119, %s121
      %p125 = scmp.eq.s32.totalorder %s22, 0
      %p126 = por %p124, %p125
      %p127 = scmp.ne.s32.totalorder %s119, %s121
      %p128 = scmp.eq.s32.totalorder %s27, 1
      %p129 = por %p127, %p128
      %p130 = scmp.ne.s32.totalorder %s121, %s122
      %p131 = scmp.eq.s32.totalorder %s27, 0
      %p132 = por %p130, %p131
      %p133 = scmp.ne.s32.totalorder %s121, %s122
      %p134 = scmp.eq.s32.totalorder %s28, 1
      %p135 = por %p133, %p134
      %p137 = scmp.ne.s32.totalorder %s122, %s136
      %p138 = scmp.eq.s32.totalorder %s28, 0
      %p139 = por %p137, %p138
      %s141 = sadd.s32 %s140, 1
      %p144 = scmp.eq.s32.totalorder %s22, 1
      %p145 = scmp.ne.s32.totalorder %s140, %s142
      %p146 = scmp.eq.s32.totalorder %s22, 0
      %p147 = por %p145, %p146
      %p148 = scmp.ne.s32.totalorder %s140, %s142
      %p149 = scmp.eq.s32.totalorder %s27, 1
      %p150 = por %p148, %p149
      %p151 = scmp.ne.s32.totalorder %s142, %s143
      %p152 = scmp.eq.s32.totalorder %s27, 0
      %p153 = por %p151, %p152
      %p154 = scmp.ne.s32.totalorder %s142, %s143
      %p155 = scmp.eq.s32.totalorder %s28, 1
      %p156 = por %p154, %p155
      %p158 = scmp.ne.s32.totalorder %s143, %s157
      %p159 = scmp.eq.s32.totalorder %s28, 0
      %p160 = por %p158, %p159
      %s162 = sadd.s32 %s161, 1
      %p165 = scmp.eq.s32.totalorder %s22, 1
      %p166 = scmp.ne.s32.totalorder %s161, %s163
      %p167 = scmp.eq.s32.totalorder %s22, 0
      %p168 = por %p166, %p167
      %p169 = scmp.ne.s32.totalorder %s161, %s163
      %p170 = scmp.eq.s32.totalorder %s27, 1
      %p171 = por %p169, %p170
      %p172 = scmp.ne.s32.totalorder %s163, %s164
      %p173 = scmp.eq.s32.totalorder %s27, 0
      %p174 = por %p172, %p173
      %p175 = scmp.ne.s32.totalorder %s163, %s164
      %p176 = scmp.eq.s32.totalorder %s28, 1
      %p177 = por %p175, %p176
      %p179 = scmp.ne.s32.totalorder %s164, %s178
      %p180 = scmp.eq.s32.totalorder %s28, 0
      %p181 = por %p179, %p180
      %s183 = sadd.s32 %s182, 1
      %p186 = scmp.eq.s32.totalorder %s22, 1
      %p187 = scmp.ne.s32.totalorder %s182, %s184
      %p188 = scmp.eq.s32.totalorder %s22, 0
      %p189 = por %p187, %p188
      %p190 = scmp.ne.s32.totalorder %s182, %s184
      %p191 = scmp.eq.s32.totalorder %s27, 1
      %p192 = por %p190, %p191
      %p193 = scmp.ne.s32.totalorder %s184, %s185
      %p194 = scmp.eq.s32.totalorder %s27, 0
      %p195 = por %p193, %p194
      %p196 = scmp.ne.s32.totalorder %s184, %s185
      %p197 = scmp.eq.s32.totalorder %s28, 1
      %p198 = por %p196, %p197
      %p200 = scmp.ne.s32.totalorder %s185, %s199
      %p201 = scmp.eq.s32.totalorder %s28, 0
      %p202 = por %p200, %p201
      %s204 = sadd.s32 %s203, 1
      %p207 = scmp.eq.s32.totalorder %s22, 1
      %p208 = scmp.ne.s32.totalorder %s203, %s205
      %p209 = scmp.eq.s32.totalorder %s22, 0
      %p210 = por %p208, %p209
      %p211 = scmp.ne.s32.totalorder %s203, %s205
      %p212 = scmp.eq.s32.totalorder %s27, 1
      %p213 = por %p211, %p212
      %p214 = scmp.ne.s32.totalorder %s205, %s206
      %p215 = scmp.eq.s32.totalorder %s27, 0
      %p216 = por %p214, %p215
      %p217 = scmp.ne.s32.totalorder %s205, %s206
      %p218 = scmp.eq.s32.totalorder %s28, 1
      %p219 = por %p217, %p218
      %p221 = scmp.ne.s32.totalorder %s206, %s220
      %p222 = scmp.eq.s32.totalorder %s28, 0
      %p223 = por %p221, %p222
      %s225 = sadd.s32 %s224, 1
      %p228 = scmp.eq.s32.totalorder %s22, 1
      %p229 = scmp.ne.s32.totalorder %s224, %s226
      %p230 = scmp.eq.s32.totalorder %s22, 0
      %p231 = por %p229, %p230
      %p232 = scmp.ne.s32.totalorder %s224, %s226
      %p233 = scmp.eq.s32.totalorder %s27, 1
      %p234 = por %p232, %p233
      %p235 = scmp.ne.s32.totalorder %s226, %s227
      %p236 = scmp.eq.s32.totalorder %s27, 0
      %p237 = por %p235, %p236
      %p238 = scmp.ne.s32.totalorder %s226, %s227
      %p239 = scmp.eq.s32.totalorder %s28, 1
      %p240 = por %p238, %p239
      %p242 = scmp.ne.s32.totalorder %s227, %s241
      %p243 = scmp.eq.s32.totalorder %s28, 0
      %p244 = por %p242, %p243
      %s246 = sadd.s32 %s245, 1
      %p249 = scmp.eq.s32.totalorder %s22, 1
      %p250 = scmp.ne.s32.totalorder %s245, %s247
      %p251 = scmp.eq.s32.totalorder %s22, 0
      %p252 = por %p250, %p251
      %p253 = scmp.ne.s32.totalorder %s245, %s247
      %p254 = scmp.eq.s32.totalorder %s27, 1
      %p255 = por %p253, %p254
      %p256 = scmp.ne.s32.totalorder %s247, %s248
      %p257 = scmp.eq.s32.totalorder %s27, 0
      %p258 = por %p256, %p257
      %p259 = scmp.ne.s32.totalorder %s247, %s248
      %p260 = scmp.eq.s32.totalorder %s28, 1
      %p261 = por %p259, %p260
      %p263 = scmp.ne.s32.totalorder %s248, %s262
      %p264 = scmp.eq.s32.totalorder %s28, 0
      %p265 = por %p263, %p264
      %s266 = ssub.s32 %s22, %s29
      %p267 = scmp.eq.s32.totalorder %s266, 0
      %s269 = sadd.s32 %s268, 1
      %s270 = scalar_select %p267, %s268, %s269
      %p273 = pneg %p267
      %p274 = scmp.eq.s32.totalorder %s22, 1
      %p275 = por %p273, %p274
      %p276 = scmp.ne.s32.totalorder %s268, %s271
      %p277 = scmp.eq.s32.totalorder %s22, 0
      %p278 = por %p276, %p277
      %p279 = scmp.ne.s32.totalorder %s268, %s271
      %p280 = scmp.eq.s32.totalorder %s27, 1
      %p281 = por %p279, %p280
      %p282 = scmp.ne.s32.totalorder %s271, %s272
      %p283 = scmp.eq.s32.totalorder %s27, 0
      %p284 = por %p282, %p283
      %p285 = scmp.ne.s32.totalorder %s271, %s272
      %p286 = scmp.eq.s32.totalorder %s28, 1
      %p287 = por %p285, %p286
      %p289 = scmp.ne.s32.totalorder %s272, %s288
      %p290 = scmp.eq.s32.totalorder %s28, 0
      %p291 = por %p289, %p290
      %p292 = scmp.le.s32.totalorder 1, %s22
      %p293 = scmp.lt.s32.totalorder %s22, 3
      %p294 = pnand %p292, %p293
      %p295 = pneg %p294
      // Predicated region
      $region9: #{image_adapter_forward.1} parent=5 // pred_check
        _
      $region10: #{image_adapter_forward.1} parent=5 // pred_check_branch
        %297 = sbr.rel (%p294) target = $region12
      $region11: #{image_adapter_forward.1} parent=5 // pred_region
        %s298 = ssub.s32 %s22, 1
        // Predicated region
        $region13: #{image_adapter_forward.1} parent=11 // pred_check
          %p299 = pneg %p69
        $region14: #{image_adapter_forward.1} parent=11 // pred_check_branch
          %301 = sbr.rel (%p299) target = $region16
        $region15: #{image_adapter_forward.1} parent=11 // pred_region
          _
        $region16: #{image_adapter_forward.1} parent=11 // pred_fallthru
          _
        // Predicated region
        $region17: #{image_adapter_forward.1} parent=11 // pred_check
          %p302 = pneg %p90
        $region18: #{image_adapter_forward.1} parent=11 // pred_check_branch
          %304 = sbr.rel (%p302) target = $region20
        $region19: #{image_adapter_forward.1} parent=11 // pred_region
          _
        $region20: #{image_adapter_forward.1} parent=11 // pred_fallthru
          _
        // Predicated region
        $region21: #{image_adapter_forward.1} parent=11 // pred_check
          %p305 = pneg %p111
        $region22: #{image_adapter_forward.1} parent=11 // pred_check_branch
          %307 = sbr.rel (%p305) target = $region24
        $region23: #{image_adapter_forward.1} parent=11 // pred_region
          _
        $region24: #{image_adapter_forward.1} parent=11 // pred_fallthru
          _
        // Predicated region
        $region25: #{image_adapter_forward.1} parent=11 // pred_check
          %p308 = pneg %p132
        $region26: #{image_adapter_forward.1} parent=11 // pred_check_branch
          %310 = sbr.rel (%p308) target = $region28
        $region27: #{image_adapter_forward.1} parent=11 // pred_region
          _
        $region28: #{image_adapter_forward.1} parent=11 // pred_fallthru
          _
        // Predicated region
        $region29: #{image_adapter_forward.1} parent=11 // pred_check
          %p311 = pneg %p153
        $region30: #{image_adapter_forward.1} parent=11 // pred_check_branch
          %313 = sbr.rel (%p311) target = $region32
        $region31: #{image_adapter_forward.1} parent=11 // pred_region
          %s315 = ssub.s32 2048, 2048
          %316 = vsyncadd [#allocation3], %s315
          %s317 = sshll.u32 [#allocation2], 4
          %s318 = int_to_ptr.vmem [resolvable:$true] %s317
          %323 = dma.hbm_to_vmem [thread:$0]  %s5, 2048, %s318, [#allocation3], 128, 128, 8
        $region32: #{image_adapter_forward.1} parent=11 // pred_fallthru
          _
        // Predicated region
        $region33: #{image_adapter_forward.1} parent=11 // pred_check
          %p324 = pneg %p174
        $region34: #{image_adapter_forward.1} parent=11 // pred_check_branch
          %326 = sbr.rel (%p324) target = $region36
        $region35: #{image_adapter_forward.1} parent=11 // pred_region
          _
        $region36: #{image_adapter_forward.1} parent=11 // pred_fallthru
          _
        // Predicated region
        $region37: #{image_adapter_forward.1} parent=11 // pred_check
          %p327 = pneg %p195
        $region38: #{image_adapter_forward.1} parent=11 // pred_check_branch
          %329 = sbr.rel (%p327) target = $region40
        $region39: #{image_adapter_forward.1} parent=11 // pred_region
          %s331 = ssub.s32 2048, 2048
          %332 = vsyncadd [#allocation6], %s331
          %s333 = sshll.u32 [#allocation5], 4
          %s334 = int_to_ptr.vmem [resolvable:$true] %s333
          %339 = dma.hbm_to_vmem [thread:$0]  %s7, 2048, %s334, [#allocation6], 128, 128, 8
        $region40: #{image_adapter_forward.1} parent=11 // pred_fallthru
          _
        // Predicated region
        $region41: #{image_adapter_forward.1} parent=11 // pred_check
          %p340 = pneg %p216
        $region42: #{image_adapter_forward.1} parent=11 // pred_check_branch
          %342 = sbr.rel (%p340) target = $region44
        $region43: #{image_adapter_forward.1} parent=11 // pred_region
          _
        $region44: #{image_adapter_forward.1} parent=11 // pred_fallthru
          _
        // Predicated region
        $region45: #{image_adapter_forward.1} parent=11 // pred_check
          %p343 = pneg %p237
        $region46: #{image_adapter_forward.1} parent=11 // pred_check_branch
          %345 = sbr.rel (%p343) target = $region48
        $region47: #{image_adapter_forward.1} parent=11 // pred_region
          %s347 = ssub.s32 2048, 2048
          %348 = vsyncadd [#allocation6], %s347
          %s349 = sshll.u32 [#allocation7], 4
          %s350 = int_to_ptr.vmem [resolvable:$true] %s349
          %355 = dma.hbm_to_vmem [thread:$0]  %s9, 2048, %s350, [#allocation6], 128, 128, 8
        $region48: #{image_adapter_forward.1} parent=11 // pred_fallthru
          _
        // Predicated region
        $region49: #{image_adapter_forward.1} parent=11 // pred_check
          %p356 = pneg %p258
        $region50: #{image_adapter_forward.1} parent=11 // pred_check_branch
          %358 = sbr.rel (%p356) target = $region52
        $region51: #{image_adapter_forward.1} parent=11 // pred_region
          _
        $region52: #{image_adapter_forward.1} parent=11 // pred_fallthru
          _
      $region12: #{image_adapter_forward.1} parent=5 // pred_fallthru
        _
      %p359 = scmp.lt.s32.totalorder %s22, 2
      // Predicated region
      $region53: #{image_adapter_forward.1} parent=5 // pred_check
        %p360 = pneg %p359
      $region54: #{image_adapter_forward.1} parent=5 // pred_check_branch
        %362 = sbr.rel (%p360) target = $region56
      $region55: #{image_adapter_forward.1} parent=5 // pred_region
        // Predicated region
        $region57: #{image_adapter_forward.1} parent=55 // pred_check
          %p363 = pneg %p42
        $region58: #{image_adapter_forward.1} parent=55 // pred_check_branch
          %365 = sbr.rel (%p363) target = $region60
        $region59: #{image_adapter_forward.1} parent=55 // pred_region
          %p366 = scmp.lt.s32.totalorder %s22, 1
          %s367 = scalar_select %p366, %s22, 1
          %s368 = smul.addr %s367, 8
          %s369 = smul.addr %s368, 8
          %s370 = scalar_lea.vmem %s0, %s369
        $region60: #{image_adapter_forward.1} parent=55 // pred_fallthru
          _
      $region56: #{image_adapter_forward.1} parent=5 // pred_fallthru
        _
      %p371 = scmp.le.s32.totalorder 1, %s22
      %p372 = scmp.lt.s32.totalorder %s22, 3
      %p373 = pnand %p371, %p372
      %p374 = pneg %p373
      // Predicated region
      $region61: #{image_adapter_forward.1} parent=5 // pred_check
        _
      $region62: #{image_adapter_forward.1} parent=5 // pred_check_branch
        %376 = sbr.rel (%p373) target = $region64
      $region63: #{image_adapter_forward.1} parent=5 // pred_region
        %s377 = ssub.s32 %s22, 1
        // Predicated region
        $region65: #{image_adapter_forward.1} parent=63 // pred_check
          %p378 = pneg %p153
        $region66: #{image_adapter_forward.1} parent=63 // pred_check_branch
          %380 = sbr.rel (%p378) target = $region68
        $region67: #{image_adapter_forward.1} parent=63 // pred_region
          %381 = dma.done [#allocation3], 2048
        $region68: #{image_adapter_forward.1} parent=63 // pred_fallthru
          _
        // Predicated region
        $region69: #{image_adapter_forward.1} parent=63 // pred_check
          %p382 = pneg %p195
        $region70: #{image_adapter_forward.1} parent=63 // pred_check_branch
          %384 = sbr.rel (%p382) target = $region72
        $region71: #{image_adapter_forward.1} parent=63 // pred_region
          %385 = dma.done [#allocation6], 2048
        $region72: #{image_adapter_forward.1} parent=63 // pred_fallthru
          _
        // Predicated region
        $region73: #{image_adapter_forward.1} parent=63 // pred_check
          %p386 = pneg %p237
        $region74: #{image_adapter_forward.1} parent=63 // pred_check_branch
          %388 = sbr.rel (%p386) target = $region76
        $region75: #{image_adapter_forward.1} parent=63 // pred_region
          %389 = dma.done [#allocation6], 2048
        $region76: #{image_adapter_forward.1} parent=63 // pred_fallthru
          _
        %p390 = scmp.lt.s32.totalorder %s27, 1
        %s391 = scalar_select %p390, %s27, 1
        %s392 = smul.addr %s391, 8
        %s393 = smul.addr %s392, 8
        %s394 = scalar_lea.vmem %s0, %s393
        %p395 = pneg %p48
        %p396 = pneg %p45
        %p397 = pneg %p69
        %p398 = pneg %p66
        %p399 = pneg %p90
        %p400 = pneg %p87
        %p401 = pneg %p111
        %p402 = pneg %p108
        %p403 = pneg %p132
        %p404 = pneg %p129
        %p405 = pneg %p153
        %p406 = pneg %p150
        %p407 = pneg %p174
        %p408 = pneg %p171
        %p409 = pneg %p195
        %p410 = pneg %p192
        %p411 = pneg %p216
        %p412 = pneg %p213
        %p413 = pneg %p237
        %p414 = pneg %p234
        %p415 = pneg %p258
        %p416 = pneg %p255
        %p417 = pneg %p284
        %p418 = pneg %p281
        %s419 = sand.u32 %s271, 1
        %s420 = scalar_lea.sflag [#allocation4], %s419
        %s421 = sand.u32 %s271, 1
        %s422 = smul.addr %s421, 4
        %s423 = scalar_lea.vmem [#allocation8], %s422
        %p424 = scmp.lt.s32.totalorder %s27, 1
        %s425 = scalar_select %p424, %s27, 1
        %s426 = smul.addr %s425, 8
        %s427 = smul.addr %s426, 8
        %s428 = scalar_lea.vmem %s0, %s427
        %v429 = vld [vmem:[%s428] sm:$0xff]
        %v430 = vld [vmem:[%s428 + $0x8] sm:$0x1]
        %v431 = vld [vmem:[%s428 + $0x10] sm:$0xff]
        %v432 = vld [vmem:[%s428 + $0x18] sm:$0x1]
        %v433 = vld [vmem:[%s428 + $0x20] sm:$0xff]
        %v434 = vld [vmem:[%s428 + $0x28] sm:$0x1]
        %v435 = vld [vmem:[%s428 + $0x30] sm:$0xff]
        %v436 = vld [vmem:[%s428 + $0x38] sm:$0x1]
        %v437 = vld [vmem:[%s1] sm:$0xf]
        %v438 = vxor.u32 %v437, 2147483648
        %v439 = vmul.f32 %v438, 1.442695
        %v440 = vpow.pop %v439
        %v441 = vadd.f32 %v440, 1.0
        %v442 = vrcp.pop %v441
        %v443 = vmul.f32 1.0, %v442
        %v448 = vrot.slane %v431, 7
        %vm449 = vcmask 1041409
        %v450 = vsel %vm449, %v448, %v429
        %v451 = vrot.slane %v433, 6
        %vm452 = vcmask 1042434
        %v453 = vsel %vm452, %v451, %v450
        %v454 = vrot.slane %v435, 5
        %vm455 = vcmask 1043459
        %v456 = vsel %vm455, %v454, %v453
        %v458 = vmul.f32 %v443, %v456
        %v459 = vld [vmem:[%s3] sm:$0xff]
        %v460 = vld [vmem:[%s3 + $0x8] sm:$0xff]
        %v461 = vld [vmem:[%s3 + $0x10] sm:$0xff]
        %v462 = vld [vmem:[%s3 + $0x18] sm:$0xff]
        %v463 = vld [vmem:[%s3 + $0x20] sm:$0xff]
        %v464 = vld [vmem:[%s3 + $0x28] sm:$0xff]
        %v465 = vld [vmem:[%s3 + $0x30] sm:$0xff]
        %v466 = vld [vmem:[%s3 + $0x38] sm:$0xff]
        %v467 = vld [vmem:[%s3 + $0x40] sm:$0xff]
        %v468 = vld [vmem:[%s3 + $0x48] sm:$0xff]
        %v469 = vld [vmem:[%s3 + $0x50] sm:$0xff]
        %v470 = vld [vmem:[%s3 + $0x58] sm:$0xff]
        %v471 = vld [vmem:[%s3 + $0x60] sm:$0xff]
        %v472 = vld [vmem:[%s3 + $0x68] sm:$0xff]
        %v473 = vld [vmem:[%s3 + $0x70] sm:$0xff]
        %v474 = vld [vmem:[%s3 + $0x78] sm:$0xff]
        %v475 = vld [vmem:[%s4] sm:$0x1]
        %v477 = vlaneseq
        %v478 = vshrl.u32 %v477, 7
        %v479 = vsub.s32 0, %v478
        %v480 = vrot.slane %v475, %v479
        %482 = vmatprep.subr.mxu0 0.0
        %483 = vmatpush1.msra.mxu0 %v459
        %484 = vmatprep.subr.mxu0 0.0
        %485 = vmatpush1.msra.mxu0 %v460
        %486 = vmatprep.subr.mxu0 0.0
        %487 = vmatpush1.msra.mxu0 %v461
        %488 = vmatprep.subr.mxu0 0.0
        %489 = vmatpush1.msra.mxu0 %v462
        %490 = vmatprep.subr.mxu0 0.0
        %491 = vmatpush1.msra.mxu0 %v463
        %492 = vmatprep.subr.mxu0 0.0
        %493 = vmatpush1.msra.mxu0 %v464
        %494 = vmatprep.subr.mxu0 0.0
        %495 = vmatpush1.msra.mxu0 %v465
        %496 = vmatprep.subr.mxu0 0.0
        %497 = vmatpush1.msra.mxu0 %v466
        %498 = vmatprep.subr.mxu0 0.0
        %499 = vmatpush1.msra.mxu0 %v467
        %500 = vmatprep.subr.mxu0 0.0
        %501 = vmatpush1.msra.mxu0 %v468
        %502 = vmatprep.subr.mxu0 0.0
        %503 = vmatpush1.msra.mxu0 %v469
        %504 = vmatprep.subr.mxu0 0.0
        %505 = vmatpush1.msra.mxu0 %v470
        %506 = vmatprep.subr.mxu0 0.0
        %507 = vmatpush1.msra.mxu0 %v471
        %508 = vmatprep.subr.mxu0 0.0
        %509 = vmatpush1.msra.mxu0 %v472
        %510 = vmatprep.subr.mxu0 0.0
        %511 = vmatpush1.msra.mxu0 %v473
        %512 = vmatprep.subr.mxu0 0.0
        %513 = vmatpush1.msra.mxu0 %v474
        %514 = vmatprep.subr.mxu0 0.0
        %515 = vmatpush1.msra.mxu0 0.0
        %516 = vmatprep.subr.mxu0 0.0
        %517 = vmatpush1.msra.mxu0 0.0
        %518 = vmatprep.subr.mxu0 0.0
        %519 = vmatpush1.msra.mxu0 0.0
        %520 = vmatprep.subr.mxu0 0.0
        %521 = vmatpush1.msra.mxu0 0.0
        %522 = vmatprep.subr.mxu0 0.0
        %523 = vmatpush1.msra.mxu0 0.0
        %524 = vmatprep.subr.mxu0 0.0
        %525 = vmatpush1.msra.mxu0 0.0
        %526 = vmatprep.subr.mxu0 0.0
        %527 = vmatpush1.msra.mxu0 0.0
        %528 = vmatprep.subr.mxu0 0.0
        %529 = vmatpush1.msra.mxu0 0.0
        %530 = vmatprep.subr.mxu0 0.0
        %531 = vmatpush1.msra.mxu0 0.0
        %532 = vmatprep.subr.mxu0 0.0
        %533 = vmatpush1.msra.mxu0 0.0
        %534 = vmatprep.subr.mxu0 0.0
        %535 = vmatpush1.msra.mxu0 0.0
        %536 = vmatprep.subr.mxu0 0.0
        %537 = vmatpush1.msra.mxu0 0.0
        %538 = vmatprep.subr.mxu0 0.0
        %539 = vmatpush1.msra.mxu0 0.0
        %540 = vmatprep.subr.mxu0 0.0
        %541 = vmatpush1.msra.mxu0 0.0
        %542 = vmatprep.subr.mxu0 0.0
        %543 = vmatpush1.msra.mxu0 0.0
        %544 = vmatprep.subr.mxu0 0.0
        %545 = vmatpush1.msra.mxu0 0.0
        %546 = vmatprep.mubr.f32.mxu0 0.0
        %547 = vmatmul.mubr.f32.gmra.mrb[0].mxu0 %v458
        %v548 = vpop.f32.mrb[0].mxu0
        %v549 = vadd.f32 %v480, %v548
        %v550 = vpop.f32.mrb[0].mxu0
        %551 = vdwg.mxu0
        %v552 = vmax.f32 %v549, 0.0
        %v553 = vld [vmem:[#allocation2] sm:$0xff]
        %v554 = vld [vmem:[#allocation2 + $0x8] sm:$0xff]
        %v555 = vld [vmem:[#allocation2 + $0x10] sm:$0xff]
        %v556 = vld [vmem:[#allocation2 + $0x18] sm:$0xff]
        %v557 = vld [vmem:[#allocation2 + $0x20] sm:$0xff]
        %v558 = vld [vmem:[#allocation2 + $0x28] sm:$0xff]
        %v559 = vld [vmem:[#allocation2 + $0x30] sm:$0xff]
        %v560 = vld [vmem:[#allocation2 + $0x38] sm:$0xff]
        %v561 = vld [vmem:[#allocation2 + $0x40] sm:$0xff]
        %v562 = vld [vmem:[#allocation2 + $0x48] sm:$0xff]
        %v563 = vld [vmem:[#allocation2 + $0x50] sm:$0xff]
        %v564 = vld [vmem:[#allocation2 + $0x58] sm:$0xff]
        %v565 = vld [vmem:[#allocation2 + $0x60] sm:$0xff]
        %v566 = vld [vmem:[#allocation2 + $0x68] sm:$0xff]
        %v567 = vld [vmem:[#allocation2 + $0x70] sm:$0xff]
        %v568 = vld [vmem:[#allocation2 + $0x78] sm:$0xff]
        %v569 = vld [vmem:[%s6] sm:$0x1]
        %v571 = vlaneseq
        %v572 = vshrl.u32 %v571, 7
        %v573 = vsub.s32 0, %v572
        %v574 = vrot.slane %v569, %v573
        %576 = vmatprep.subr.mxu0 0.0
        %577 = vmatpush1.msra.mxu0 %v553
        %578 = vmatprep.subr.mxu0 0.0
        %579 = vmatpush1.msra.mxu0 %v554
        %580 = vmatprep.subr.mxu0 0.0
        %581 = vmatpush1.msra.mxu0 %v555
        %582 = vmatprep.subr.mxu0 0.0
        %583 = vmatpush1.msra.mxu0 %v556
        %584 = vmatprep.subr.mxu0 0.0
        %585 = vmatpush1.msra.mxu0 %v557
        %586 = vmatprep.subr.mxu0 0.0
        %587 = vmatpush1.msra.mxu0 %v558
        %588 = vmatprep.subr.mxu0 0.0
        %589 = vmatpush1.msra.mxu0 %v559
        %590 = vmatprep.subr.mxu0 0.0
        %591 = vmatpush1.msra.mxu0 %v560
        %592 = vmatprep.subr.mxu0 0.0
        %593 = vmatpush1.msra.mxu0 %v561
        %594 = vmatprep.subr.mxu0 0.0
        %595 = vmatpush1.msra.mxu0 %v562
        %596 = vmatprep.subr.mxu0 0.0
        %597 = vmatpush1.msra.mxu0 %v563
        %598 = vmatprep.subr.mxu0 0.0
        %599 = vmatpush1.msra.mxu0 %v564
        %600 = vmatprep.subr.mxu0 0.0
        %601 = vmatpush1.msra.mxu0 %v565
        %602 = vmatprep.subr.mxu0 0.0
        %603 = vmatpush1.msra.mxu0 %v566
        %604 = vmatprep.subr.mxu0 0.0
        %605 = vmatpush1.msra.mxu0 %v567
        %606 = vmatprep.subr.mxu0 0.0
        %607 = vmatpush1.msra.mxu0 %v568
        %608 = vmatprep.subr.mxu0 0.0
        %609 = vmatpush1.msra.mxu0 0.0
        %610 = vmatprep.subr.mxu0 0.0
        %611 = vmatpush1.msra.mxu0 0.0
        %612 = vmatprep.subr.mxu0 0.0
        %613 = vmatpush1.msra.mxu0 0.0
        %614 = vmatprep.subr.mxu0 0.0
        %615 = vmatpush1.msra.mxu0 0.0
        %616 = vmatprep.subr.mxu0 0.0
        %617 = vmatpush1.msra.mxu0 0.0
        %618 = vmatprep.subr.mxu0 0.0
        %619 = vmatpush1.msra.mxu0 0.0
        %620 = vmatprep.subr.mxu0 0.0
        %621 = vmatpush1.msra.mxu0 0.0
        %622 = vmatprep.subr.mxu0 0.0
        %623 = vmatpush1.msra.mxu0 0.0
        %624 = vmatprep.subr.mxu0 0.0
        %625 = vmatpush1.msra.mxu0 0.0
        %626 = vmatprep.subr.mxu0 0.0
        %627 = vmatpush1.msra.mxu0 0.0
        %628 = vmatprep.subr.mxu0 0.0
        %629 = vmatpush1.msra.mxu0 0.0
        %630 = vmatprep.subr.mxu0 0.0
        %631 = vmatpush1.msra.mxu0 0.0
        %632 = vmatprep.subr.mxu0 0.0
        %633 = vmatpush1.msra.mxu0 0.0
        %634 = vmatprep.subr.mxu0 0.0
        %635 = vmatpush1.msra.mxu0 0.0
        %636 = vmatprep.subr.mxu0 0.0
        %637 = vmatpush1.msra.mxu0 0.0
        %638 = vmatprep.subr.mxu0 0.0
        %639 = vmatpush1.msra.mxu0 0.0
        %640 = vmatprep.mubr.f32.mxu0 0.0
        %641 = vmatmul.mubr.f32.gmra.mrb[0].mxu0 %v552
        %v642 = vpop.f32.mrb[0].mxu0
        %v643 = vadd.f32 %v574, %v642
        %v644 = vpop.f32.mrb[0].mxu0
        %645 = vdwg.mxu0
        %v646 = vld [vmem:[%s2] sm:$0xf]
        %v647 = vxor.u32 %v646, 2147483648
        %v648 = vmul.f32 %v647, 1.442695
        %v649 = vpow.pop %v648
        %v650 = vadd.f32 %v649, 1.0
        %v651 = vrcp.pop %v650
        %v652 = vmul.f32 1.0, %v651
        %v655 = vunpack.c.l.s4 1966171168
        %v656 = vunpack.c.0.s8 %v655
        %v657 = vlaneseq
        %v658 = vshrl.u32 %v657, 7
        %v659 = vsub.s32 %v656, %v658
        %v660 = vrot.slane %v652, %v659
        %v661 = vcombine.high %v660, %v660
        %v663 = vunpack.c.l.s4 1966171168
        %v664 = vunpack.c.0.s8 %v663
        %v665 = vlaneseq
        %v666 = vshrl.u32 %v665, 7
        %v667 = vsub.s32 %v664, %v666
        %v668 = vrot.slane %v660, %v667
        %v670 = vunpack.c.l.s4 1966171168
        %v671 = vunpack.c.0.s8 %v670
        %v672 = vlaneseq
        %v673 = vshrl.u32 %v672, 7
        %v674 = vsub.s32 %v671, %v673
        %v675 = vrot.slane %v661, %v674
        %v676 = vcombine.high %v668, %v668
        %v677 = vcombine.high %v675, %v675
        %v678 = vlaneseq
        %v679 = vshrl.u32 %v678, 7
        %v680 = vsub.s32 0, %v679
        %v681 = vrot.slane %v668, %v680
        %v682 = vlaneseq
        %v683 = vshrl.u32 %v682, 7
        %v684 = vsub.s32 0, %v683
        %v685 = vrot.slane %v675, %v684
        %v686 = vlaneseq
        %v687 = vshrl.u32 %v686, 7
        %v688 = vsub.s32 0, %v687
        %v689 = vrot.slane %v676, %v688
        %v690 = vlaneseq
        %v691 = vshrl.u32 %v690, 7
        %v692 = vsub.s32 0, %v691
        %v693 = vrot.slane %v677, %v692
        %v698 = vmul.f32 %v681, %v429
        %v699 = vmul.f32 %v681, %v430
        %v700 = vmul.f32 %v685, %v431
        %v701 = vmul.f32 %v685, %v432
        %v702 = vmul.f32 %v689, %v433
        %v703 = vmul.f32 %v689, %v434
        %v704 = vmul.f32 %v693, %v435
        %v705 = vmul.f32 %v693, %v436
        %vm714 = vcmask 1046528
        %v715 = vrot.slane %v698, 1
        %v716 = vrot.slane %v699, 1
        %v717 = vsel %vm714, %v715, %v716
        %v718 = vrot.slane %v700, 1
        %v719 = vrot.slane %v701, 1
        %v720 = vsel %vm714, %v718, %v719
        %v721 = vrot.slane %v702, 1
        %v722 = vrot.slane %v703, 1
        %v723 = vsel %vm714, %v721, %v722
        %v724 = vrot.slane %v704, 1
        %v725 = vrot.slane %v705, 1
        %v726 = vsel %vm714, %v724, %v725
        %v731 = vld [vmem:[#allocation5] sm:$0xff]
        %v732 = vld [vmem:[#allocation5 + $0x8] sm:$0xff]
        %v733 = vld [vmem:[#allocation5 + $0x10] sm:$0xff]
        %v734 = vld [vmem:[#allocation5 + $0x18] sm:$0xff]
        %v735 = vld [vmem:[#allocation5 + $0x20] sm:$0xff]
        %v736 = vld [vmem:[#allocation5 + $0x28] sm:$0xff]
        %v737 = vld [vmem:[#allocation5 + $0x30] sm:$0xff]
        %v738 = vld [vmem:[#allocation5 + $0x38] sm:$0xff]
        %v739 = vld [vmem:[#allocation5 + $0x40] sm:$0xff]
        %v740 = vld [vmem:[#allocation5 + $0x48] sm:$0xff]
        %v741 = vld [vmem:[#allocation5 + $0x50] sm:$0xff]
        %v742 = vld [vmem:[#allocation5 + $0x58] sm:$0xff]
        %v743 = vld [vmem:[#allocation5 + $0x60] sm:$0xff]
        %v744 = vld [vmem:[#allocation5 + $0x68] sm:$0xff]
        %v745 = vld [vmem:[#allocation5 + $0x70] sm:$0xff]
        %v746 = vld [vmem:[#allocation5 + $0x78] sm:$0xff]
        %v747 = vld [vmem:[%s8] sm:$0x1]
        %v749 = vlaneseq
        %v750 = vshrl.u32 %v749, 7
        %v751 = vsub.s32 0, %v750
        %v752 = vrot.slane %v747, %v751
        %754 = vmatprep.subr.mxu0 0.0
        %755 = vmatpush1.msra.mxu0 %v731
        %756 = vmatprep.subr.mxu0 0.0
        %757 = vmatpush1.msra.mxu0 %v732
        %758 = vmatprep.subr.mxu0 0.0
        %759 = vmatpush1.msra.mxu0 %v733
        %760 = vmatprep.subr.mxu0 0.0
        %761 = vmatpush1.msra.mxu0 %v734
        %762 = vmatprep.subr.mxu0 0.0
        %763 = vmatpush1.msra.mxu0 %v735
        %764 = vmatprep.subr.mxu0 0.0
        %765 = vmatpush1.msra.mxu0 %v736
        %766 = vmatprep.subr.mxu0 0.0
        %767 = vmatpush1.msra.mxu0 %v737
        %768 = vmatprep.subr.mxu0 0.0
        %769 = vmatpush1.msra.mxu0 %v738
        %770 = vmatprep.subr.mxu0 0.0
        %771 = vmatpush1.msra.mxu0 %v739
        %772 = vmatprep.subr.mxu0 0.0
        %773 = vmatpush1.msra.mxu0 %v740
        %774 = vmatprep.subr.mxu0 0.0
        %775 = vmatpush1.msra.mxu0 %v741
        %776 = vmatprep.subr.mxu0 0.0
        %777 = vmatpush1.msra.mxu0 %v742
        %778 = vmatprep.subr.mxu0 0.0
        %779 = vmatpush1.msra.mxu0 %v743
        %780 = vmatprep.subr.mxu0 0.0
        %781 = vmatpush1.msra.mxu0 %v744
        %782 = vmatprep.subr.mxu0 0.0
        %783 = vmatpush1.msra.mxu0 %v745
        %784 = vmatprep.subr.mxu0 0.0
        %785 = vmatpush1.msra.mxu0 %v746
        %786 = vmatprep.subr.mxu0 0.0
        %787 = vmatpush1.msra.mxu0 0.0
        %788 = vmatprep.subr.mxu0 0.0
        %789 = vmatpush1.msra.mxu0 0.0
        %790 = vmatprep.subr.mxu0 0.0
        %791 = vmatpush1.msra.mxu0 0.0
        %792 = vmatprep.subr.mxu0 0.0
        %793 = vmatpush1.msra.mxu0 0.0
        %794 = vmatprep.subr.mxu0 0.0
        %795 = vmatpush1.msra.mxu0 0.0
        %796 = vmatprep.subr.mxu0 0.0
        %797 = vmatpush1.msra.mxu0 0.0
        %798 = vmatprep.subr.mxu0 0.0
        %799 = vmatpush1.msra.mxu0 0.0
        %800 = vmatprep.subr.mxu0 0.0
        %801 = vmatpush1.msra.mxu0 0.0
        %802 = vmatprep.subr.mxu0 0.0
        %803 = vmatpush1.msra.mxu0 0.0
        %804 = vmatprep.subr.mxu0 0.0
        %805 = vmatpush1.msra.mxu0 0.0
        %806 = vmatprep.subr.mxu0 0.0
        %807 = vmatpush1.msra.mxu0 0.0
        %808 = vmatprep.subr.mxu0 0.0
        %809 = vmatpush1.msra.mxu0 0.0
        %810 = vmatprep.subr.mxu0 0.0
        %811 = vmatpush1.msra.mxu0 0.0
        %812 = vmatprep.subr.mxu0 0.0
        %813 = vmatpush1.msra.mxu0 0.0
        %814 = vmatprep.subr.mxu0 0.0
        %815 = vmatpush1.msra.mxu0 0.0
        %816 = vmatprep.subr.mxu0 0.0
        %817 = vmatpush1.msra.mxu0 0.0
        %818 = vmatprep.mubr.f32.mxu0 0.0
        %819 = vmatmul.mubr.f32.gmra.mrb[0].mxu0 %v717
        %v820 = vpop.f32.mrb[0].mxu0
        %v821 = vadd.f32 %v752, %v820
        %v822 = vpop.f32.mrb[0].mxu0
        %823 = vmatprep.mubr.f32.mxu0 0.0
        %824 = vmatmul.mubr.f32.gmra.mrb[0].mxu0 %v720
        %v825 = vpop.f32.mrb[0].mxu0
        %v826 = vadd.f32 %v752, %v825
        %v827 = vpop.f32.mrb[0].mxu0
        %828 = vmatprep.mubr.f32.mxu0 0.0
        %829 = vmatmul.mubr.f32.gmra.mrb[0].mxu0 %v723
        %v830 = vpop.f32.mrb[0].mxu0
        %v831 = vadd.f32 %v752, %v830
        %v832 = vpop.f32.mrb[0].mxu0
        %833 = vmatprep.mubr.f32.mxu0 0.0
        %834 = vmatmul.mubr.f32.gmra.mrb[0].mxu0 %v726
        %v835 = vpop.f32.mrb[0].mxu0
        %v836 = vadd.f32 %v752, %v835
        %v837 = vpop.f32.mrb[0].mxu0
        %838 = vdwg.mxu0
        %v839 = vmax.f32 %v821, 0.0
        %v840 = vmax.f32 %v826, 0.0
        %v841 = vmax.f32 %v831, 0.0
        %v842 = vmax.f32 %v836, 0.0
        %v843 = vrot.slane %v839, 4
        %v844 = vadd.f32 %v839, %v843
        %v845 = vrot.slane %v844, 2
        %v846 = vadd.f32 %v844, %v845
        %v847 = vrot.slane %v846, 1
        %v848 = vadd.f32 %v846, %v847
        %v849 = vrot.slane %v840, 4
        %v850 = vadd.f32 %v840, %v849
        %v851 = vrot.slane %v850, 2
        %v852 = vadd.f32 %v850, %v851
        %v853 = vrot.slane %v852, 1
        %v854 = vadd.f32 %v852, %v853
        %v855 = vrot.slane %v841, 4
        %v856 = vadd.f32 %v841, %v855
        %v857 = vrot.slane %v856, 2
        %v858 = vadd.f32 %v856, %v857
        %v859 = vrot.slane %v858, 1
        %v860 = vadd.f32 %v858, %v859
        %v861 = vrot.slane %v842, 4
        %v862 = vadd.f32 %v842, %v861
        %v863 = vrot.slane %v862, 2
        %v864 = vadd.f32 %v862, %v863
        %v865 = vrot.slane %v864, 1
        %v866 = vadd.f32 %v864, %v865
        %v867 = vrcp.pop 8.0
        %v868 = vmul.f32 %v848, %v867
        %v869 = vmul.f32 %v854, %v867
        %v870 = vmul.f32 %v860, %v867
        %v871 = vmul.f32 %v866, %v867
        %v872 = vld [vmem:[#allocation7] sm:$0xff]
        %v873 = vld [vmem:[#allocation7 + $0x8] sm:$0xff]
        %v874 = vld [vmem:[#allocation7 + $0x10] sm:$0xff]
        %v875 = vld [vmem:[#allocation7 + $0x18] sm:$0xff]
        %v876 = vld [vmem:[#allocation7 + $0x20] sm:$0xff]
        %v877 = vld [vmem:[#allocation7 + $0x28] sm:$0xff]
        %v878 = vld [vmem:[#allocation7 + $0x30] sm:$0xff]
        %v879 = vld [vmem:[#allocation7 + $0x38] sm:$0xff]
        %v880 = vld [vmem:[#allocation7 + $0x40] sm:$0xff]
        %v881 = vld [vmem:[#allocation7 + $0x48] sm:$0xff]
        %v882 = vld [vmem:[#allocation7 + $0x50] sm:$0xff]
        %v883 = vld [vmem:[#allocation7 + $0x58] sm:$0xff]
        %v884 = vld [vmem:[#allocation7 + $0x60] sm:$0xff]
        %v885 = vld [vmem:[#allocation7 + $0x68] sm:$0xff]
        %v886 = vld [vmem:[#allocation7 + $0x70] sm:$0xff]
        %v887 = vld [vmem:[#allocation7 + $0x78] sm:$0xff]
        %v888 = vld [vmem:[%s10] sm:$0x1]
        %v890 = vlaneseq
        %v891 = vshrl.u32 %v890, 7
        %v892 = vsub.s32 0, %v891
        %v893 = vrot.slane %v888, %v892
        %v899 = vsel %vm449, %v869, %v868
        %v900 = vsel %vm452, %v870, %v899
        %v901 = vsel %vm455, %v871, %v900
        %903 = vmatprep.subr.mxu0 0.0
        %904 = vmatpush1.msra.mxu0 %v872
        %905 = vmatprep.subr.mxu0 0.0
        %906 = vmatpush1.msra.mxu0 %v873
        %907 = vmatprep.subr.mxu0 0.0
        %908 = vmatpush1.msra.mxu0 %v874
        %909 = vmatprep.subr.mxu0 0.0
        %910 = vmatpush1.msra.mxu0 %v875
        %911 = vmatprep.subr.mxu0 0.0
        %912 = vmatpush1.msra.mxu0 %v876
        %913 = vmatprep.subr.mxu0 0.0
        %914 = vmatpush1.msra.mxu0 %v877
        %915 = vmatprep.subr.mxu0 0.0
        %916 = vmatpush1.msra.mxu0 %v878
        %917 = vmatprep.subr.mxu0 0.0
        %918 = vmatpush1.msra.mxu0 %v879
        %919 = vmatprep.subr.mxu0 0.0
        %920 = vmatpush1.msra.mxu0 %v880
        %921 = vmatprep.subr.mxu0 0.0
        %922 = vmatpush1.msra.mxu0 %v881
        %923 = vmatprep.subr.mxu0 0.0
        %924 = vmatpush1.msra.mxu0 %v882
        %925 = vmatprep.subr.mxu0 0.0
        %926 = vmatpush1.msra.mxu0 %v883
        %927 = vmatprep.subr.mxu0 0.0
        %928 = vmatpush1.msra.mxu0 %v884
        %929 = vmatprep.subr.mxu0 0.0
        %930 = vmatpush1.msra.mxu0 %v885
        %931 = vmatprep.subr.mxu0 0.0
        %932 = vmatpush1.msra.mxu0 %v886
        %933 = vmatprep.subr.mxu0 0.0
        %934 = vmatpush1.msra.mxu0 %v887
        %935 = vmatprep.subr.mxu0 0.0
        %936 = vmatpush1.msra.mxu0 0.0
        %937 = vmatprep.subr.mxu0 0.0
        %938 = vmatpush1.msra.mxu0 0.0
        %939 = vmatprep.subr.mxu0 0.0
        %940 = vmatpush1.msra.mxu0 0.0
        %941 = vmatprep.subr.mxu0 0.0
        %942 = vmatpush1.msra.mxu0 0.0
        %943 = vmatprep.subr.mxu0 0.0
        %944 = vmatpush1.msra.mxu0 0.0
        %945 = vmatprep.subr.mxu0 0.0
        %946 = vmatpush1.msra.mxu0 0.0
        %947 = vmatprep.subr.mxu0 0.0
        %948 = vmatpush1.msra.mxu0 0.0
        %949 = vmatprep.subr.mxu0 0.0
        %950 = vmatpush1.msra.mxu0 0.0
        %951 = vmatprep.subr.mxu0 0.0
        %952 = vmatpush1.msra.mxu0 0.0
        %953 = vmatprep.subr.mxu0 0.0
        %954 = vmatpush1.msra.mxu0 0.0
        %955 = vmatprep.subr.mxu0 0.0
        %956 = vmatpush1.msra.mxu0 0.0
        %957 = vmatprep.subr.mxu0 0.0
        %958 = vmatpush1.msra.mxu0 0.0
        %959 = vmatprep.subr.mxu0 0.0
        %960 = vmatpush1.msra.mxu0 0.0
        %961 = vmatprep.subr.mxu0 0.0
        %962 = vmatpush1.msra.mxu0 0.0
        %963 = vmatprep.subr.mxu0 0.0
        %964 = vmatpush1.msra.mxu0 0.0
        %965 = vmatprep.subr.mxu0 0.0
        %966 = vmatpush1.msra.mxu0 0.0
        %967 = vmatprep.mubr.f32.mxu0 0.0
        %968 = vmatmul.mubr.f32.gmra.mrb[0].mxu0 %v901
        %v969 = vpop.f32.mrb[0].mxu0
        %v970 = vadd.f32 %v893, %v969
        %v971 = vpop.f32.mrb[0].mxu0
        %972 = vdwg.mxu0
        %v973 = vadd.f32 %v643, %v970
        %974 = vst [vmem:[%s423] sm:$0xf] %v973
        %s975 = sand.u32 %s271, 1
        %s976 = scalar_lea.sflag [#allocation4], %s975
        %s977 = sand.u32 %s271, 1
        %s978 = smul.addr %s977, 4
        %s979 = scalar_lea.vmem [#allocation8], %s978
        // Predicated region
        $region77: #{image_adapter_forward.1} parent=63 // pred_check
          %p980 = pneg %p281
        $region78: #{image_adapter_forward.1} parent=63 // pred_check_branch
          %982 = sbr.rel (%p980) target = $region80
        $region79: #{image_adapter_forward.1} parent=63 // pred_region
          %s984 = ssub.s32 64, 64
          %985 = vsyncadd %s976, %s984
          %s986 = smul.addr %s27, 64
          %s987 = scalar_lea.hbm %s11, %s986
          %s989 = sshll.u32 %s979, 4
          %s990 = int_to_ptr.vmem [resolvable:$true] %s989
          %992 = dma.vmem_to_hbm [thread:$0]  %s990, 64, %s987, %s976
        $region80: #{image_adapter_forward.1} parent=63 // pred_fallthru
          _
      $region64: #{image_adapter_forward.1} parent=5 // pred_fallthru
        _
      %p993 = scmp.le.s32.totalorder 2, %s22
      // Predicated region
      $region81: #{image_adapter_forward.1} parent=5 // pred_check
        %p994 = pneg %p993
      $region82: #{image_adapter_forward.1} parent=5 // pred_check_branch
        %996 = sbr.rel (%p994) target = $region84
      $region83: #{image_adapter_forward.1} parent=5 // pred_region
        %s997 = ssub.s32 %s22, 2
        // Predicated region
        $region85: #{image_adapter_forward.1} parent=83 // pred_check
          %p998 = pneg %p287
        $region86: #{image_adapter_forward.1} parent=83 // pred_check_branch
          %1000 = sbr.rel (%p998) target = $region88
        $region87: #{image_adapter_forward.1} parent=83 // pred_region
          %s1001 = sand.u32 %s272, 1
          %s1002 = scalar_lea.sflag [#allocation4], %s1001
          %s1003 = sand.u32 %s272, 1
          %s1004 = smul.addr %s1003, 4
          %s1005 = scalar_lea.vmem [#allocation8], %s1004
          %1006 = dma.done %s1002, 64
        $region88: #{image_adapter_forward.1} parent=83 // pred_fallthru
          _
      $region84: #{image_adapter_forward.1} parent=5 // pred_fallthru
        _
    $region6: #{image_adapter_forward.1} parent=1 // loop_footer
      %s26 = sadd.s32 1, %s22
    $region7: #{image_adapter_forward.1} parent=1 // loop_footer_branch
      %21 = sbr.rel target = $region3
    $region8: #{image_adapter_forward.1} parent=1 // loop_exit
      _
    %1007 = vsyncpa [#allocation3], 1
    %s1008 = scalar_lea.sflag [#allocation3], 1
    %1009 = vsyncpa %s1008, 1
    %1010 = vsyncpa [#allocation6], 1
    %1011 = vsyncpa [#allocation4], 1
    %s1012 = scalar_lea.sflag [#allocation4], 1
    %1013 = vsyncpa %s1012, 1

</llo_original>
